<compile_context>
chip_gen: v7x
topology: tpu7x:2x2x1
jax: 0.10.0
libtpu: 0.0.40
codegen_flags: <defaults>
</compile_context>

<pallas_src>
import jax
import jax.numpy as jnp
import numpy as np
from jax.experimental import pallas as pl
from jax.experimental.pallas import tpu as pltpu


# ------------------------------ hardware helpers ----------------------------- #

def _vmem_capacity_bytes():
    """Physical VMEM per TensorCore; conservative fallback if the query fails."""
    try:
        return int(pltpu.get_tpu_info().vmem_capacity_bytes)
    except Exception:
        return 64 << 20                      # v7x-sized (smallest current gen)


def _is_v7x():
    try:
        kind = jax.devices()[0].device_kind.lower()
    except Exception:
        return False
    return "7" in kind                        # "tpu7x" / "tpu v7" style strings


_BUFFERED1_OK = None


def _buffered1_supported():
    """Probe once whether pipeline_mode=pl.Buffered(1) is accepted by this
    jax/Mosaic build.  Single-buffering grid-invariant operands halves their
    VMEM footprint (their block index never changes, so double-buffering buys
    nothing)."""
    global _BUFFERED1_OK
    if _BUFFERED1_OK is None:
        def _copy(x_ref, o_ref):
            o_ref[...] = x_ref[...]
        try:
            out = pl.pallas_call(
                _copy, grid=(2,),
                in_specs=[pl.BlockSpec((8, 128), lambda i: (0, 0),
                                       pipeline_mode=pl.Buffered(1))],
                out_specs=pl.BlockSpec((8, 128), lambda i: (0, 0)),
                out_shape=jax.ShapeDtypeStruct((8, 128), jnp.float32),
            )(jnp.zeros((8, 128), jnp.float32))
            jax.block_until_ready(out)
            _BUFFERED1_OK = True
        except Exception:
            _BUFFERED1_OK = False
    return _BUFFERED1_OK


def _inv_spec(shape, index_map):
    """BlockSpec for a grid-invariant operand (block index never changes)."""
    if _buffered1_supported():
        return pl.BlockSpec(shape, index_map, pipeline_mode=pl.Buffered(1))
    return pl.BlockSpec(shape, index_map)


def _pick_tile_v(V, H, cap_bytes):
    """Largest lane-dense vocab tile that divides V and keeps the
    double-buffered bf16 W_cls tile a small fraction of VMEM."""
    max_tile = 1024 if cap_bytes <= (64 << 20) else 2048      # v7x: halved VMEM
    for t in (2048, 1024, 512, 256, 128):
        if t <= max_tile and V % t == 0 and 2 * H * t * 2 <= cap_bytes // 8:
            return t
    # TODO(synk): masked partial-store path for V % 128 != 0 is untested here.
    return V


# ------------------------ once-per-sequence encoder prep --------------------- #

def _enc_proj_kernel(enc_ref, we_ref, out_ref):
    out_ref[...] = jnp.dot(enc_ref[...], we_ref[...],
                           preferred_element_type=jnp.float32).astype(jnp.bfloat16)


def prepare_encoder(encoder_outputs, W_e):
    """Once per source sequence: bf16-cast the encoder outputs and hoist the
    enc @ W_e projection out of the per-token decode step.  Both tensors are
    re-read HBM->VMEM every decode step, so bf16 halves that recurring DMA."""
    B, S, H = encoder_outputs.shape
    enc_bf16 = encoder_outputs.astype(jnp.bfloat16)
    enc2d = enc_bf16.reshape(B * S, H)
    R = B * S
    tile_r = next((t for t in (512, 256, 128, 64, 32, 16, 8) if R % t == 0), R)

    cap = _vmem_capacity_bytes()
    est = (2 * (tile_r * H * 2)      # double-buffered bf16 input tile
           + H * H * 2               # W_e (invariant, single-buffered)
           + 2 * (tile_r * H * 2))   # double-buffered bf16 output tile
    vmem_limit = int(np.clip(2 * est, 16 << 20, cap - (8 << 20)))

    enc_proj = pl.pallas_call(
        _enc_proj_kernel,
        grid=(R // tile_r,),
        in_specs=[pl.BlockSpec((tile_r, H), lambda i: (i, 0)),
                  _inv_spec((H, H), lambda i: (0, 0))],
        out_specs=pl.BlockSpec((tile_r, H), lambda i: (i, 0)),
        out_shape=jax.ShapeDtypeStruct((R, H), jnp.bfloat16),
        compiler_params=pltpu.CompilerParams(
            dimension_semantics=("parallel",),
            vmem_limit_bytes=vmem_limit),
    )(enc2d, W_e.astype(jnp.bfloat16))
    return enc_bf16, enc_proj.reshape(B, S, H)


# --------------------------- once-per-model param prep ----------------------- #

def prepare_decoder_params(params):
    """Hoist all per-step weight massaging out of the decode loop: bf16 casts,
    the w_ih[:E]/w_ih[E:] split, fused b_ih+b_hh biases, and the concatenated
    [W_x ; W_hh] per-layer matrices used by the merged recurrent matmuls."""
    E = params['embedding'].shape[1]
    bf16 = jnp.bfloat16
    l0 = params['lstm'][0]
    prep = {
        'embedding': params['embedding'].astype(jnp.float32),
        'W_h': params['W_h'].astype(bf16),
        'W_e': params['W_e'].astype(bf16),
        'v': params['v'].astype(jnp.float32),
        # TODO(synk): on v7x the MXU consumes fp8 natively; storing W_cls (and
        # LSTM weights) in fp8 with per-column scales would halve the dominant
        # per-step W_cls traffic.  Kept bf16 here for v5e/v6e portability.
        'W_cls': params['W_cls'].astype(bf16),
        'b_cls': params['b_cls'].astype(jnp.float32),
        'wih_emb': l0['w_ih'][:E].astype(bf16),
        'w_cat': [jnp.concatenate([l0['w_ih'][E:], l0['w_hh']], axis=0).astype(bf16)],
        'bias': [(l0['b_ih'] + l0['b_hh']).astype(jnp.float32)],
    }
    for p in params['lstm'][1:]:
        prep['w_cat'].append(
            jnp.concatenate([p['w_ih'], p['w_hh']], axis=0).astype(bf16))
        prep['bias'].append((p['b_ih'] + p['b_hh']).astype(jnp.float32))
    return prep


# ------------------------------ kernel bodies -------------------------------- #

def _recurrent_body(num_layers, H,
                    emb_ref, hprev_ref, cprev_ref, enc_ref, encp_ref,
                    wh_ref, v_ref, wih_emb_ref, wcat0_ref, b0_ref, upper,
                    h_out_ref, c_out_ref):
    """Bahdanau attention + all LSTM layers; returns the top hidden state (f32)."""

    def mm(x_bf16, w_ref):
        return jnp.dot(x_bf16, w_ref[...], preferred_element_type=jnp.float32)

    def cell(gates, c):
        # Gate slices are lane-aligned when H % 128 == 0 (no relayouts).
        i_g = jax.nn.sigmoid(gates[:, 0 * H:1 * H])
        f_g = jax.nn.sigmoid(gates[:, 1 * H:2 * H])
        g_g = jnp.tanh(gates[:, 2 * H:3 * H])
        o_g = jax.nn.sigmoid(gates[:, 3 * H:4 * H])
        c_new = f_g * c + i_g * g_g
        h_new = o_g * jnp.tanh(c_new)
        return h_new, c_new

    # --- attention (enc @ W_e hoisted out; v-score on VPU+XLU, not MXU).
    # h/c are read per layer to bound vreg live ranges.
    top_bf = hprev_ref[num_layers - 1].astype(jnp.bfloat16)            # (B, H)
    ph = mm(top_bf, wh_ref)                                            # (B, H) f32
    t = jnp.tanh(ph[:, None, :] + encp_ref[...].astype(jnp.float32))   # (B, S, H)
    scores = jnp.sum(t * v_ref[...][None, :, :], axis=-1)              # (B, S)
    # TODO(synk): optional source-padding mask (masked_fill -1e10) not wired
    # through; this is the Seq2Seq.forward mask=None path.
    scores = scores - jnp.max(scores, axis=-1, keepdims=True)
    e = jnp.exp(scores)
    w = e / jnp.sum(e, axis=-1, keepdims=True)                         # f32 softmax
    ctx = jnp.sum(w[:, :, None] * enc_ref[...].astype(jnp.float32), axis=1)

    # --- layer 0: emb @ W_emb + [ctx, h0] @ [W_ctx ; W_hh] + b  (2 MXU matmuls)
    xh = jnp.concatenate([ctx.astype(jnp.bfloat16),
                          hprev_ref[0].astype(jnp.bfloat16)], axis=-1)  # (B, 2H)
    gates = (mm(emb_ref[...].astype(jnp.bfloat16), wih_emb_ref)
             + mm(xh, wcat0_ref) + b0_ref[...])
    h_new, c_new = cell(gates, cprev_ref[0])
    h_out_ref[0] = h_new
    c_out_ref[0] = c_new
    x = h_new

    # --- layers 1..L-1: one fused (B,2H)x(2H,4H) matmul each
    for l in range(1, num_layers):
        wcat_ref, b_ref = upper[2 * (l - 1)], upper[2 * (l - 1) + 1]
        xh = jnp.concatenate([x.astype(jnp.bfloat16),
                              hprev_ref[l].astype(jnp.bfloat16)], axis=-1)
        gates = mm(xh, wcat_ref) + b_ref[...]
        h_new, c_new = cell(gates, cprev_ref[l])
        h_out_ref[l] = h_new
        c_out_ref[l] = c_new
        x = h_new
    return x


def _make_fused_step_kernel(num_layers, hidden_dim):
    """One fused kernel: attention + L LSTM cells + classifier vocab tile."""
    H = hidden_dim
    n_in = 12 + 2 * (num_layers - 1)

    def kernel(*refs):
        (emb_ref, hprev_ref, cprev_ref, enc_ref, encp_ref, wh_ref, v_ref,
         wih_emb_ref, wcat0_ref, b0_ref) = refs[:10]
        upper = refs[10:10 + 2 * (num_layers - 1)]
        wcls_ref, bcls_ref = refs[n_in - 2], refs[n_in - 1]
        logits_ref, h_out_ref, c_out_ref = refs[n_in:n_in + 3]
        x_scr = refs[n_in + 3]

        # Recurrent part runs once (vocab tile 0); the top hidden state stays
        # cached in VMEM scratch for every subsequent classifier tile.
        @pl.when(pl.program_id(0) == 0)
        def _():
            x = _recurrent_body(num_layers, H, emb_ref, hprev_ref, cprev_ref,
                                enc_ref, encp_ref, wh_ref, v_ref, wih_emb_ref,
                                wcat0_ref, b0_ref, upper, h_out_ref, c_out_ref)
            x_scr[...] = x.astype(jnp.bfloat16)

        # Classifier: one lane-dense vocab tile per grid step (streams W_cls).
        logits_ref[...] = (jnp.dot(x_scr[...], wcls_ref[...],
                                   preferred_element_type=jnp.float32)
                           + bcls_ref[...])

    return kernel


def _make_recurrent_kernel(num_layers, hidden_dim):
    """Recurrent part only (split form for v7x)."""
    H = hidden_dim

    def kernel(*refs):
        (emb_ref, hprev_ref, cprev_ref, enc_ref, encp_ref, wh_ref, v_ref,
         wih_emb_ref, wcat0_ref, b0_ref) = refs[:10]
        upper = refs[10:10 + 2 * (num_layers - 1)]
        x_out_ref, h_out_ref, c_out_ref = refs[10 + 2 * (num_layers - 1):]
        x = _recurrent_body(num_layers, H, emb_ref, hprev_ref, cprev_ref,
                            enc_ref, encp_ref, wh_ref, v_ref, wih_emb_ref,
                            wcat0_ref, b0_ref, upper, h_out_ref, c_out_ref)
        x_out_ref[...] = x.astype(jnp.bfloat16)

    return kernel


def _classifier_kernel(x_ref, wcls_ref, bcls_ref, logits_ref):
    logits_ref[...] = (jnp.dot(x_ref[...], wcls_ref[...],
                               preferred_element_type=jnp.float32)
                       + bcls_ref[...])


# -------------------------------- forward pass ------------------------------- #

def bahdanau_decoder_forward(prep, tokens, decoder_state, enc_bf16, enc_proj,
                             *, tile_v=None, split_classifier=None):
    """One decode step of BahdanauAttentionDecoder (rnn_type='lstm', mask=None).

    `prep` from prepare_decoder_params; (enc_bf16, enc_proj) from
    prepare_encoder — both computed once, outside the per-token loop.
    NOTE: decoder_state is aliased/donated into the new state; callers must not
    reuse the old (h, c) arrays after this call.
    """
    h_prev, c_prev = decoder_state                      # each (L, B, H) f32
    L, B, H = h_prev.shape
    S = enc_bf16.shape[1]
    E = prep['embedding'].shape[1]
    V = prep['W_cls'].shape[1]

    cap = _vmem_capacity_bytes()
    if tile_v is None:
        tile_v = _pick_tile_v(V, H, cap)
    if V % tile_v != 0:
        tile_v = V
    n_tiles = V // tile_v
    if split_classifier is None:
        # v7x has 2 TensorCores; a "parallel" vocab axis lets both stream W_cls.
        split_classifier = _is_v7x() and n_tiles > 1

    # Embedding lookup (data-dependent gather) stays in JAX glue; dropout is
    # identity at inference.
    embedded = prep['embedding'][tokens[:, 0]]          # (B, E) f32

    rec_args = [embedded, h_prev, c_prev, enc_bf16, enc_proj,
                prep['W_h'], prep['v'], prep['wih_emb'],
                prep['w_cat'][0], prep['bias'][0]]
    for l in range(1, L):
        rec_args += [prep['w_cat'][l], prep['bias'][l]]

    single = _buffered1_supported()
    inv_bytes = (B * E * 4 + 2 * L * B * H * 4 + 2 * B * S * H * 2
                 + H * H * 2 + H * 4 + E * 4 * H * 2
                 + L * (2 * H * 4 * H * 2) + L * (4 * H * 4))
    if not single:
        inv_bytes *= 2

    if not split_classifier:
        # ---------------- fully fused single call (v5e / v6e default) --------
        args = rec_args + [prep['W_cls'], prep['b_cls']]
        in_specs = [
            _inv_spec((B, E), lambda j: (0, 0)),             # embedded
            _inv_spec((L, B, H), lambda j: (0, 0, 0)),       # h_prev
            _inv_spec((L, B, H), lambda j: (0, 0, 0)),       # c_prev
            _inv_spec((B, S, H), lambda j: (0, 0, 0)),       # encoder outputs bf16
            _inv_spec((B, S, H), lambda j: (0, 0, 0)),       # enc @ W_e bf16
            _inv_spec((H, H), lambda j: (0, 0)),             # W_h
            _inv_spec((1, H), lambda j: (0, 0)),             # v
            _inv_spec((E, 4 * H), lambda j: (0, 0)),         # w_ih[:E]   (layer 0)
            _inv_spec((2 * H, 4 * H), lambda j: (0, 0)),     # [w_ih[E:]; w_hh]
            _inv_spec((1, 4 * H), lambda j: (0, 0)),         # fused bias (layer 0)
        ]
        for _ in range(L - 1):
            in_specs += [_inv_spec((2 * H, 4 * H), lambda j: (0, 0)),
                         _inv_spec((1, 4 * H), lambda j: (0, 0))]
        # Only the classifier tiles change block index with j -> keep default
        # double-buffering so their DMA overlaps the MXU matmul.
        in_specs += [pl.BlockSpec((H, tile_v), lambda j: (0, j)),
                     pl.BlockSpec((1, tile_v), lambda j: (0, j))]
        out_specs = (pl.BlockSpec((B, tile_v), lambda j: (0, j)),
                     pl.BlockSpec((L, B, H), lambda j: (0, 0, 0)),
                     pl.BlockSpec((L, B, H), lambda j: (0, 0, 0)))
        out_shape = (jax.ShapeDtypeStruct((B, V), jnp.float32),
                     jax.ShapeDtypeStruct((L, B, H), jnp.float32),
                     jax.ShapeDtypeStruct((L, B, H), jnp.float32))

        est = (inv_bytes + B * H * 2 + 2 * (2 * L * B * H * 4)
               + 2 * (H * tile_v * 2 + tile_v * 4 + B * tile_v * 4))
        vmem_limit = int(np.clip(2 * est, 16 << 20, cap - (8 << 20)))

        logits, h_new, c_new = pl.pallas_call(
            _make_fused_step_kernel(L, H),
            grid=(n_tiles,),
            in_specs=in_specs,
            out_specs=out_specs,
            out_shape=out_shape,
            scratch_shapes=[pltpu.VMEM((B, H), jnp.bfloat16)],   # cached top hidden
            input_output_aliases={1: 1, 2: 2},                   # h, c in place
            compiler_params=pltpu.CompilerParams(
                # Vocab axis carries the resident h/c outputs -> "arbitrary".
                dimension_semantics=("arbitrary",),
                vmem_limit_bytes=vmem_limit),
        )(*args)
        return logits[:, None, :], (h_new, c_new)

    # ---------------- split form (v7x): recurrent call + parallel classifier --
    rec_est = inv_bytes + B * H * 2 + 2 * L * B * H * 4
    rec_vmem = int(np.clip(2 * rec_est, 16 << 20, cap - (8 << 20)))
    vmem_full = pl.BlockSpec(memory_space=pltpu.MemorySpace.VMEM)
    x_top, h_new, c_new = pl.pallas_call(
        _make_recurrent_kernel(L, H),
        in_specs=[vmem_full] * len(rec_args),
        out_specs=(vmem_full, vmem_full, vmem_full),
        out_shape=(jax.ShapeDtypeStruct((B, H), jnp.bfloat16),
                   jax.ShapeDtypeStruct((L, B, H), jnp.float32),
                   jax.ShapeDtypeStruct((L, B, H), jnp.float32)),
        input_output_aliases={1: 1, 2: 2},
        compiler_params=pltpu.CompilerParams(vmem_limit_bytes=rec_vmem),
    )(*rec_args)

    cls_est = ((1 if single else 2) * B * H * 2
               + 2 * (H * tile_v * 2 + tile_v * 4 + B * tile_v * 4))
    cls_vmem = int(np.clip(2 * cls_est, 16 << 20, cap - (8 << 20)))
    logits = pl.pallas_call(
        _classifier_kernel,
        grid=(n_tiles,),
        in_specs=[_inv_spec((B, H), lambda j: (0, 0)),
                  pl.BlockSpec((H, tile_v), lambda j: (0, j)),
                  pl.BlockSpec((1, tile_v), lambda j: (0, j))],
        out_specs=pl.BlockSpec((B, tile_v), lambda j: (0, j)),
        out_shape=jax.ShapeDtypeStruct((B, V), jnp.float32),
        compiler_params=pltpu.CompilerParams(
            dimension_semantics=("parallel",),      # shard tiles across the 2 TCs
            vmem_limit_bytes=cls_vmem),
    )(x_top, prep['W_cls'], prep['b_cls'])
    return logits[:, None, :], (h_new, c_new)


# ----------------------------- pure-JAX reference ---------------------------- #

def reference_forward(params, tokens, decoder_state, encoder_outputs):
    """Pure-JAX reference mirroring the kernels' dtype strategy (bf16 matmul
    inputs, bf16 enc/enc_proj storage, f32 accumulation / gate math)."""
    bf16 = jnp.bfloat16

    def mm(x, w):
        return jnp.dot(x.astype(bf16), w.astype(bf16),
                       preferred_element_type=jnp.float32)

    h_prev, c_prev = decoder_state
    B, S, H = encoder_outputs.shape
    emb = params['embedding'][tokens[:, 0]]
    enc_bf = encoder_outputs.astype(bf16)
    enc_proj = mm(enc_bf.reshape(B * S, H),
                  params['W_e']).astype(bf16).reshape(B, S, H)
    top = h_prev[-1]
    t = jnp.tanh(mm(top, params['W_h'])[:, None, :] + enc_proj.astype(jnp.float32))
    scores = jnp.sum(t * params['v'][None, :, :], axis=-1)
    scores = scores - jnp.max(scores, axis=-1, keepdims=True)
    e = jnp.exp(scores)
    w = e / jnp.sum(e, axis=-1, keepdims=True)
    ctx = jnp.sum(w[:, :, None] * enc_bf.astype(jnp.float32), axis=1)
    x = jnp.concatenate([emb, ctx], axis=-1)
    hs, cs = [], []
    for l, p in enumerate(params['lstm']):
        gates = mm(x, p['w_ih']) + mm(h_prev[l], p['w_hh']) + p['b_ih'] + p['b_hh']
        i_g = jax.nn.sigmoid(gates[:, 0 * H:1 * H])
        f_g = jax.nn.sigmoid(gates[:, 1 * H:2 * H])
        g_g = jnp.tanh(gates[:, 2 * H:3 * H])
        o_g = jax.nn.sigmoid(gates[:, 3 * H:4 * H])
        c_new = f_g * c_prev[l] + i_g * g_g
        h_new = o_g * jnp.tanh(c_new)
        hs.append(h_new)
        cs.append(c_new)
        x = h_new
    logits = (mm(x, params['W_cls']) + params['b_cls'])[:, None, :]
    return logits, (jnp.stack(hs), jnp.stack(cs))


# ----------------------------------- params ---------------------------------- #

def init_params(key, vocab_size, embed_dim, hidden_dim, num_layers):
    def u(k, shape, fan_in, dtype=jnp.float32):
        s = 1.0 / np.sqrt(fan_in)
        return jax.random.uniform(k, shape, jnp.float32, -s, s).astype(dtype)

    keys = jax.random.split(key, 6 + 4 * num_layers)
    bf16 = jnp.bfloat16
    params = {
        'embedding': jax.random.normal(keys[0], (vocab_size, embed_dim), jnp.float32),
        'W_h': u(keys[1], (hidden_dim, hidden_dim), hidden_dim, bf16),   # fc_hidden
        'W_e': u(keys[2], (hidden_dim, hidden_dim), hidden_dim, bf16),   # fc_encoder
        'v': u(keys[3], (1, hidden_dim), hidden_dim),                    # fc_v, f32
        'W_cls': u(keys[4], (hidden_dim, vocab_size), hidden_dim, bf16),
        'b_cls': u(keys[5], (1, vocab_size), hidden_dim),
        'lstm': [],
    }
    in_dim = embed_dim + hidden_dim
    for l in range(num_layers):
        k0, k1, k2, k3 = keys[6 + 4 * l: 10 + 4 * l]
        d = in_dim if l == 0 else hidden_dim
        params['lstm'].append({
            'w_ih': u(k0, (d, 4 * hidden_dim), hidden_dim, bf16),
            'w_hh': u(k1, (hidden_dim, 4 * hidden_dim), hidden_dim, bf16),
            'b_ih': u(k2, (1, 4 * hidden_dim), hidden_dim),
            'b_hh': u(k3, (1, 4 * hidden_dim), hidden_dim),
        })
    return params


# ------------------------------------ main ------------------------------------ #

if __name__ == "__main__":
    # Small but hardware-aligned shapes: B multiple of 8 (sublane), H multiple
    # of 128 (lane) so vregs/MXU tiles and the gate slices are unpadded.
    VOCAB, EMBED, HIDDEN, LAYERS = 512, 64, 128, 2
    B, S = 8, 16

    key = jax.random.PRNGKey(0)
    k_par, k_tok, k_h, k_c, k_enc = jax.random.split(key, 5)

    params = init_params(k_par, VOCAB, EMBED, HIDDEN, LAYERS)
    tokens = jax.random.randint(k_tok, (B, 1), 0, VOCAB, dtype=jnp.int32)
    h0 = jax.random.normal(k_h, (LAYERS, B, HIDDEN), jnp.float32)
    c0 = jax.random.normal(k_c, (LAYERS, B, HIDDEN), jnp.float32)
    enc = jax.random.normal(k_enc, (B, S, HIDDEN), jnp.float32)

    ref_logits, (ref_h, ref_c) = reference_forward(params, tokens, (h0, c0), enc)

    # Hoisted per-model / per-sequence prep (runs once, outside the decode loop).
    prep = prepare_decoder_params(params)
    enc_bf16, enc_proj = prepare_encoder(enc, prep['W_e'])

    def check(logits, h_new, c_new):
        assert logits.shape == (B, 1, VOCAB)
        assert h_new.shape == (LAYERS, B, HIDDEN)
        assert c_new.shape == (LAYERS, B, HIDDEN)
        np.testing.assert_allclose(np.asarray(logits), np.asarray(ref_logits),
                                   rtol=3e-3, atol=3e-3)
        np.testing.assert_allclose(np.asarray(h_new), np.asarray(ref_h),
                                   rtol=3e-3, atol=3e-3)
        np.testing.assert_allclose(np.asarray(c_new), np.asarray(ref_c),
                                   rtol=3e-3, atol=3e-3)

    # 1) Fully fused single-call step (v5e/v6e form).  tile_v=128 forces the
    #    multi-tile W_cls streaming + pl.when-gated recurrent path even at this
    #    small demo vocab (production use: leave tile_v=None for auto-pick).
    logits, (h_new, c_new) = bahdanau_decoder_forward(
        prep, tokens, (jnp.copy(h0), jnp.copy(c0)), enc_bf16, enc_proj,
        tile_v=128, split_classifier=False)
    jax.block_until_ready((logits, h_new, c_new))
    check(logits, h_new, c_new)

    # 2) Split form (v7x default): recurrent call + "parallel" classifier grid.
    logits2, (h_new2, c_new2) = bahdanau_decoder_forward(
        prep, tokens, (jnp.copy(h0), jnp.copy(c0)), enc_bf16, enc_proj,
        tile_v=128, split_classifier=True)
    jax.block_until_ready((logits2, h_new2, c_new2))
    check(logits2, h_new2, c_new2)

    print("KERNEL_OK")
</pallas_src>

<mosaic_0001>
module attributes {stable_mosaic.version = 11 : i64} {
  func.func @_copy(%arg0: i32, %arg1: memref<8x128xf32, #tpu.memory_space<vmem>>, %arg2: memref<8x128xf32, #tpu.memory_space<vmem>>) attributes {dimension_semantics = [#tpu.dimension_semantics<arbitrary>], iteration_bounds = array<i64: 2>, scalar_prefetch = 0 : i64, scratch_operands = 0 : i64, tpu.core_type = #tpu.core_type<tc>, window_params = [{pipeline_mode = #tpu.pipeline_mode<synchronous>, transform_indices = @transform_0, window_bounds = array<i64: 8, 128>}, {pipeline_mode = #tpu.pipeline_mode<synchronous>, transform_indices = @transform_1, window_bounds = array<i64: 8, 128>}]} {
    %c0 = arith.constant 0 : index
    %c0_0 = arith.constant 0 : index
    %0 = vector.load %arg1[%c0, %c0_0] : memref<8x128xf32, #tpu.memory_space<vmem>>, vector<8x128xf32>
    %c0_1 = arith.constant 0 : index
    %c0_2 = arith.constant 0 : index
    %1 = vector.load %arg2[%c0_1, %c0_2] : memref<8x128xf32, #tpu.memory_space<vmem>>, vector<8x128xf32>
    tpu.vector_store %arg2[%c0_1, %c0_2], %0 {strides = array<i32>} : memref<8x128xf32, #tpu.memory_space<vmem>>, vector<8x128xf32>,
    return
  }
  func.func @transform_0(%arg0: i32) -> (i32, i32) {
    %c0_i32 = arith.constant 0 : i32
    %c0_i32_0 = arith.constant 0 : i32
    %c0_i32_1 = arith.constant 0 : i32
    return %c0_i32, %c0_i32_0 : i32, i32
  }
  func.func @transform_1(%arg0: i32) -> (i32, i32) {
    %c0_i32 = arith.constant 0 : i32
    %c0_i32_0 = arith.constant 0 : i32
    %c0_i32_1 = arith.constant 0 : i32
    return %c0_i32, %c0_i32_0 : i32, i32
  }
}

module attributes {stable_mosaic.version = 11 : i64} {
  func.func @_enc_proj_kernel(%arg0: i32, %arg1: memref<128x128xbf16, #tpu.memory_space<vmem>>, %arg2: memref<128x128xbf16, #tpu.memory_space<vmem>>, %arg3: memref<128x128xbf16, #tpu.memory_space<vmem>>) attributes {dimension_semantics = [#tpu.dimension_semantics<parallel>], iteration_bounds = array<i64: 1>, scalar_prefetch = 0 : i64, scratch_operands = 0 : i64, tpu.core_type = #tpu.core_type<tc>, window_params = [{transform_indices = @transform_0, window_bounds = array<i64: 128, 128>}, {pipeline_mode = #tpu.pipeline_mode<synchronous>, transform_indices = @transform_1, window_bounds = array<i64: 128, 128>}, {transform_indices = @transform_2, window_bounds = array<i64: 128, 128>}]} {
    %c0 = arith.constant 0 : index
    %c0_0 = arith.constant 0 : index
    %0 = vector.load %arg1[%c0, %c0_0] : memref<128x128xbf16, #tpu.memory_space<vmem>>, vector<128x128xbf16>
    %c0_1 = arith.constant 0 : index
    %c0_2 = arith.constant 0 : index
    %1 = vector.load %arg2[%c0_1, %c0_2] : memref<128x128xbf16, #tpu.memory_space<vmem>>, vector<128x128xbf16>
    %cst = arith.constant dense<0.000000e+00> : vector<128x128xf32>
    %2 = tpu.matmul %0, %1, %cst {dimension_numbers = #tpu.dot_dimension_numbers<[1], [0], [0], [1], [0, 0, 1, 1], [], []>} : vector<128x128xbf16>, vector<128x128xbf16>, vector<128x128xf32> -> vector<128x128xf32>
    %3 = arith.truncf %2 : vector<128x128xf32> to vector<128x128xbf16>
    %c0_3 = arith.constant 0 : index
    %c0_4 = arith.constant 0 : index
    %4 = vector.load %arg3[%c0_3, %c0_4] : memref<128x128xbf16, #tpu.memory_space<vmem>>, vector<128x128xbf16>
    tpu.vector_store %arg3[%c0_3, %c0_4], %3 {strides = array<i32>} : memref<128x128xbf16, #tpu.memory_space<vmem>>, vector<128x128xbf16>,
    return
  }
  func.func @transform_0(%arg0: i32) -> (i32, i32) {
    %c0_i32 = arith.constant 0 : i32
    %c0_i32_0 = arith.constant 0 : i32
    return %arg0, %c0_i32 : i32, i32
  }
  func.func @transform_1(%arg0: i32) -> (i32, i32) {
    %c0_i32 = arith.constant 0 : i32
    %c0_i32_0 = arith.constant 0 : i32
    %c0_i32_1 = arith.constant 0 : i32
    return %c0_i32, %c0_i32_0 : i32, i32
  }
  func.func @transform_2(%arg0: i32) -> (i32, i32) {
    %c0_i32 = arith.constant 0 : i32
    %c0_i32_0 = arith.constant 0 : i32
    return %arg0, %c0_i32 : i32, i32
  }
}

</mosaic_0001>

<llo_original>
// kernel: tpu_custom_call.1
$region0: #{tpu_custom_call.1}
  #allocation0 [shape = 'u32[]', space=smem, size = 0x4, offset = 0x4, fixed_abs, tag = 'smem constant byte address 0x4 - core index']
  #allocation1 [shape = 'u32[144,128]{1,0:T(1,128)}', space=vmem, size = 0x12000, scoped, tag = 'internal scratch']
  %s0 = inlined_call_operand.hbm [shape: f32[8,128], index: 0, kind: input, shape index: {}]
  %s1 = inlined_call_operand.hbm [shape: f32[8,128], index: 1, kind: output, shape index: {}]
  %s2 = sld [smem:[#allocation0]]
  $region41: #{tpu_custom_call.1} parent=0
    _
  %s4 = ssub.s32 1, %s2
  %s5 = scalar_select 0, %s4, %s2
  $region1: #{tpu_custom_call.1} parent=0
    #allocation2 [shape = 'u8[4096]{0}', space=vmem, size = 0x1000, scoped, tag = 'input window, operand 0, single buffered']
    #allocation3 [shape = 's32[2]{0}', space=sflag, size = 0x8, scoped, tag = 'scoped memory for tpu_custom_call.1']
    #allocation4 [shape = 's32[2]{0}', space=sflag, size = 0x8, scoped, tag = 'scoped memory for tpu_custom_call.1']
    #allocation5 [shape = 'u8[4096]{0}', space=vmem, size = 0x1000, scoped, tag = 'output window, operand 0, single buffered']
    %6 = vsyncpa [#allocation3], 0
    %7 = vsyncpa [#allocation4], 0
    loop: start=0, step=1, limit=4
    $region2: #{tpu_custom_call.1} parent=1 // loop_pre_header
      _
    $region3: #{tpu_custom_call.1} parent=1 // loop_header
      %s9 = sphi 0, %s13
      %p10 = scmp.ge.s32.totalorder %s9, 4
      %s17 = sphi 0, %s17
      %s19 = sphi 0, %s17
      %s20 = sphi 0, %s19
      %s34 = sphi 0, %s20
      %s38 = sphi 0, %s38
      %s40 = sphi 0, %s38
      %s41 = sphi 0, %s40
      %s55 = sphi 0, %s41
    $region4: #{tpu_custom_call.1} parent=1 // loop_header_branch
      %12 = sbr.rel (%p10) target = $region8
    $region5: #{tpu_custom_call.1} parent=1 // loop_body
      %s14 = ssub.s32 %s9, 1
      %s15 = ssub.s32 %s9, 2
      %s16 = sadd.s32 %s9, 1
      %s18 = sadd.s32 %s17, 1
      %p21 = scmp.eq.s32.totalorder %s9, 1
      %p22 = scmp.ne.s32.totalorder %s17, %s19
      %p23 = scmp.eq.s32.totalorder %s9, 0
      %p24 = por %p22, %p23
      %p25 = scmp.ne.s32.totalorder %s17, %s19
      %p26 = scmp.eq.s32.totalorder %s14, 1
      %p27 = por %p25, %p26
      %p28 = scmp.ne.s32.totalorder %s19, %s20
      %p29 = scmp.eq.s32.totalorder %s14, 0
      %p30 = por %p28, %p29
      %p31 = scmp.ne.s32.totalorder %s19, %s20
      %p32 = scmp.eq.s32.totalorder %s15, 1
      %p33 = por %p31, %p32
      %p35 = scmp.ne.s32.totalorder %s20, %s34
      %p36 = scmp.eq.s32.totalorder %s15, 0
      %p37 = por %p35, %p36
      %s39 = sadd.s32 %s38, 1
      %p42 = scmp.eq.s32.totalorder %s9, 1
      %p43 = scmp.ne.s32.totalorder %s38, %s40
      %p44 = scmp.eq.s32.totalorder %s9, 0
      %p45 = por %p43, %p44
      %p46 = scmp.ne.s32.totalorder %s38, %s40
      %p47 = scmp.eq.s32.totalorder %s14, 1
      %p48 = por %p46, %p47
      %p49 = scmp.ne.s32.totalorder %s40, %s41
      %p50 = scmp.eq.s32.totalorder %s14, 0
      %p51 = por %p49, %p50
      %p52 = scmp.ne.s32.totalorder %s40, %s41
      %p53 = scmp.eq.s32.totalorder %s15, 1
      %p54 = por %p52, %p53
      %p56 = scmp.ne.s32.totalorder %s41, %s55
      %p57 = scmp.eq.s32.totalorder %s15, 0
      %p58 = por %p56, %p57
      %p59 = scmp.le.s32.totalorder 1, %s9
      %p60 = scmp.lt.s32.totalorder %s9, 3
      %p61 = pnand %p59, %p60
      %p62 = pneg %p61
      // Predicated region
      $region9: #{tpu_custom_call.1} parent=5 // pred_check
        _
      $region10: #{tpu_custom_call.1} parent=5 // pred_check_branch
        %64 = sbr.rel (%p61) target = $region12
      $region11: #{tpu_custom_call.1} parent=5 // pred_region
        %s65 = ssub.s32 %s9, 1
        // Predicated region
        $region13: #{tpu_custom_call.1} parent=11 // pred_check
          %p66 = pneg %p30
        $region14: #{tpu_custom_call.1} parent=11 // pred_check_branch
          %68 = sbr.rel (%p66) target = $region16
        $region15: #{tpu_custom_call.1} parent=11 // pred_region
          %s70 = ssub.s32 128, 128
          %71 = vsyncadd [#allocation3], %s70
          %s73 = sshll.u32 [#allocation2], 4
          %s74 = int_to_ptr.vmem [resolvable:$true] %s73
          %76 = dma.hbm_to_vmem [thread:$0]  %s0, 128, %s74, [#allocation3]
        $region16: #{tpu_custom_call.1} parent=11 // pred_fallthru
          _
      $region12: #{tpu_custom_call.1} parent=5 // pred_fallthru
        _
      %p77 = scmp.lt.s32.totalorder %s9, 2
      // Predicated region
      $region17: #{tpu_custom_call.1} parent=5 // pred_check
        %p78 = pneg %p77
      $region18: #{tpu_custom_call.1} parent=5 // pred_check_branch
        %80 = sbr.rel (%p78) target = $region20
      $region19: #{tpu_custom_call.1} parent=5 // pred_region
        _
      $region20: #{tpu_custom_call.1} parent=5 // pred_fallthru
        _
      %p81 = scmp.le.s32.totalorder 1, %s9
      %p82 = scmp.lt.s32.totalorder %s9, 3
      %p83 = pnand %p81, %p82
      %p84 = pneg %p83
      // Predicated region
      $region21: #{tpu_custom_call.1} parent=5 // pred_check
        _
      $region22: #{tpu_custom_call.1} parent=5 // pred_check_branch
        %86 = sbr.rel (%p83) target = $region24
      $region23: #{tpu_custom_call.1} parent=5 // pred_region
        %s87 = ssub.s32 %s9, 1
        // Predicated region
        $region25: #{tpu_custom_call.1} parent=23 // pred_check
          %p88 = pneg %p30
        $region26: #{tpu_custom_call.1} parent=23 // pred_check_branch
          %90 = sbr.rel (%p88) target = $region28
        $region27: #{tpu_custom_call.1} parent=23 // pred_region
          %91 = dma.done [#allocation3], 128
        $region28: #{tpu_custom_call.1} parent=23 // pred_fallthru
          _
        %p92 = pneg %p30
        %p93 = pneg %p27
        %p94 = pneg %p51
        %p95 = pneg %p48
        %v96 = vld [vmem:[#allocation2] sm:$0xff]
        %97 = vst [vmem:[#allocation5] sm:$0xff] %v96
        // Predicated region
        $region29: #{tpu_custom_call.1} parent=23 // pred_check
          %p98 = pneg %p48
        $region30: #{tpu_custom_call.1} parent=23 // pred_check_branch
          %100 = sbr.rel (%p98) target = $region32
        $region31: #{tpu_custom_call.1} parent=23 // pred_region
          %s102 = ssub.s32 128, 128
          %103 = vsyncadd [#allocation4], %s102
          %s105 = sshll.u32 [#allocation5], 4
          %s106 = int_to_ptr.vmem [resolvable:$true] %s105
          %108 = dma.vmem_to_hbm [thread:$0]  %s106, 128, %s1, [#allocation4]
        $region32: #{tpu_custom_call.1} parent=23 // pred_fallthru
          _
        // Predicated region
        $region33: #{tpu_custom_call.1} parent=23 // pred_check
          %p109 = pneg %p48
        $region34: #{tpu_custom_call.1} parent=23 // pred_check_branch
          %111 = sbr.rel (%p109) target = $region36
        $region35: #{tpu_custom_call.1} parent=23 // pred_region
          %112 = dma.done [#allocation4], 128
        $region36: #{tpu_custom_call.1} parent=23 // pred_fallthru
          _
      $region24: #{tpu_custom_call.1} parent=5 // pred_fallthru
        _
      %p113 = scmp.le.s32.totalorder 2, %s9
      // Predicated region
      $region37: #{tpu_custom_call.1} parent=5 // pred_check
        %p114 = pneg %p113
      $region38: #{tpu_custom_call.1} parent=5 // pred_check_branch
        %116 = sbr.rel (%p114) target = $region40
      $region39: #{tpu_custom_call.1} parent=5 // pred_region
        %s117 = ssub.s32 %s9, 2
      $region40: #{tpu_custom_call.1} parent=5 // pred_fallthru
        _
    $region6: #{tpu_custom_call.1} parent=1 // loop_footer
      %s13 = sadd.s32 1, %s9
    $region7: #{tpu_custom_call.1} parent=1 // loop_footer_branch
      %8 = sbr.rel target = $region3
    $region8: #{tpu_custom_call.1} parent=1 // loop_exit
      _
    %118 = vsyncpa [#allocation3], 1
    %s119 = scalar_lea.sflag [#allocation3], 1
    %120 = vsyncpa %s119, 1
    %121 = vsyncpa [#allocation4], 1
    %s122 = scalar_lea.sflag [#allocation4], 1
    %123 = vsyncpa %s122, 1

// kernel: tpu_custom_call.1
$region0: #{tpu_custom_call.1}
  #allocation0 [shape = 'u32[]', space=smem, size = 0x4, offset = 0x4, fixed_abs, tag = 'smem constant byte address 0x4 - core index']
  #allocation1 [shape = 'u32[144,128]{1,0:T(1,128)}', space=vmem, size = 0x12000, scoped, tag = 'internal scratch']
  %s0 = inlined_call_operand.hbm [shape: bf16[128,128], index: 0, kind: input, shape index: {}]
  %s1 = inlined_call_operand.hbm [shape: bf16[128,128], index: 1, kind: input, shape index: {}]
  %s2 = inlined_call_operand.hbm [shape: bf16[128,128], index: 2, kind: output, shape index: {}]
  %s3 = sld [smem:[#allocation0]]
  $region26: #{tpu_custom_call.1} parent=0
    _
  %s5 = ssub.s32 1, %s3
  %s6 = scalar_select 0, %s5, %s3
  $region1: #{tpu_custom_call.1} parent=0
    #allocation2 [shape = 'u8[32768]{0}', space=vmem, size = 0x8000, scoped, tag = 'input window, operand 0, single buffered']
    #allocation3 [shape = 's32[1]{0}', space=sflag, size = 0x4, scoped, tag = 'scoped memory for tpu_custom_call.1']
    #allocation4 [shape = 's32[1]{0}', space=sflag, size = 0x4, scoped, tag = 'scoped memory for tpu_custom_call.1']
    #allocation5 [shape = 'u8[32768]{0}', space=vmem, size = 0x8000, scoped, tag = 'input window, operand 1, single buffered']
    #allocation6 [shape = 's32[1]{0}', space=sflag, size = 0x4, scoped, tag = 'scoped memory for tpu_custom_call.1']
    #allocation7 [shape = 'u8[32768]{0}', space=vmem, size = 0x8000, scoped, tag = 'output window, operand 0, single buffered']
    %7 = vsyncpa [#allocation3], 0
    %8 = vsyncpa [#allocation6], 0
    %9 = vsyncpa [#allocation4], 0
    // Predicated region
    $region2: #{tpu_custom_call.1} parent=1 // pred_check
      _
    $region3: #{tpu_custom_call.1} parent=1 // pred_check_branch
      %11 = sbr.rel (0) target = $region5
    $region4: #{tpu_custom_call.1} parent=1 // pred_region
      %s13 = ssub.s32 1024, 1024
      %14 = vsyncadd [#allocation3], %s13
      %s15 = sshll.u32 [#allocation2], 4
      %s16 = int_to_ptr.vmem [resolvable:$true] %s15
      %21 = dma.hbm_to_vmem [thread:$0]  %s0, 1024, %s16, [#allocation3], 64, 64, 4
    $region5: #{tpu_custom_call.1} parent=1 // pred_fallthru
      _
    // Predicated region
    $region6: #{tpu_custom_call.1} parent=1 // pred_check
      _
    $region7: #{tpu_custom_call.1} parent=1 // pred_check_branch
      %23 = sbr.rel (0) target = $region9
    $region8: #{tpu_custom_call.1} parent=1 // pred_region
      %s25 = ssub.s32 1024, 1024
      %26 = vsyncadd [#allocation6], %s25
      %s27 = sshll.u32 [#allocation5], 4
      %s28 = int_to_ptr.vmem [resolvable:$true] %s27
      %33 = dma.hbm_to_vmem [thread:$0]  %s1, 1024, %s28, [#allocation6], 64, 64, 4
    $region9: #{tpu_custom_call.1} parent=1 // pred_fallthru
      _
    // Predicated region
    $region10: #{tpu_custom_call.1} parent=1 // pred_check
      _
    $region11: #{tpu_custom_call.1} parent=1 // pred_check_branch
      %35 = sbr.rel (0) target = $region13
    $region12: #{tpu_custom_call.1} parent=1 // pred_region
      %36 = dma.done [#allocation3], 1024
    $region13: #{tpu_custom_call.1} parent=1 // pred_fallthru
      _
    // Predicated region
    $region14: #{tpu_custom_call.1} parent=1 // pred_check
      _
    $region15: #{tpu_custom_call.1} parent=1 // pred_check_branch
      %38 = sbr.rel (0) target = $region17
    $region16: #{tpu_custom_call.1} parent=1 // pred_region
      %39 = dma.done [#allocation6], 1024
    $region17: #{tpu_custom_call.1} parent=1 // pred_fallthru
      _
    %v41 = vld [vmem:[#allocation2] sm:$0xf]
    %v42 = vld [vmem:[#allocation2 + $0x4] sm:$0xf]
    %v43 = vld [vmem:[#allocation2 + $0x8] sm:$0xf]
    %v44 = vld [vmem:[#allocation2 + $0xc] sm:$0xf]
    %v45 = vld [vmem:[#allocation2 + $0x10] sm:$0xf]
    %v46 = vld [vmem:[#allocation2 + $0x14] sm:$0xf]
    %v47 = vld [vmem:[#allocation2 + $0x18] sm:$0xf]
    %v48 = vld [vmem:[#allocation2 + $0x1c] sm:$0xf]
    %v49 = vld [vmem:[#allocation2 + $0x20] sm:$0xf]
    %v50 = vld [vmem:[#allocation2 + $0x24] sm:$0xf]
    %v51 = vld [vmem:[#allocation2 + $0x28] sm:$0xf]
    %v52 = vld [vmem:[#allocation2 + $0x2c] sm:$0xf]
    %v53 = vld [vmem:[#allocation2 + $0x30] sm:$0xf]
    %v54 = vld [vmem:[#allocation2 + $0x34] sm:$0xf]
    %v55 = vld [vmem:[#allocation2 + $0x38] sm:$0xf]
    %v56 = vld [vmem:[#allocation2 + $0x3c] sm:$0xf]
    %v57 = vld [vmem:[#allocation5] sm:$0xf]
    %v58 = vld [vmem:[#allocation5 + $0x4] sm:$0xf]
    %v59 = vld [vmem:[#allocation5 + $0x8] sm:$0xf]
    %v60 = vld [vmem:[#allocation5 + $0xc] sm:$0xf]
    %v61 = vld [vmem:[#allocation5 + $0x10] sm:$0xf]
    %v62 = vld [vmem:[#allocation5 + $0x14] sm:$0xf]
    %v63 = vld [vmem:[#allocation5 + $0x18] sm:$0xf]
    %v64 = vld [vmem:[#allocation5 + $0x1c] sm:$0xf]
    %v65 = vld [vmem:[#allocation5 + $0x20] sm:$0xf]
    %v66 = vld [vmem:[#allocation5 + $0x24] sm:$0xf]
    %v67 = vld [vmem:[#allocation5 + $0x28] sm:$0xf]
    %v68 = vld [vmem:[#allocation5 + $0x2c] sm:$0xf]
    %v69 = vld [vmem:[#allocation5 + $0x30] sm:$0xf]
    %v70 = vld [vmem:[#allocation5 + $0x34] sm:$0xf]
    %v71 = vld [vmem:[#allocation5 + $0x38] sm:$0xf]
    %v72 = vld [vmem:[#allocation5 + $0x3c] sm:$0xf]
    %v89 = vunpack.c.l.b16 %v41
    %v90 = vunpack.c.l.b16 %v42
    %v91 = vunpack.c.l.b16 %v43
    %v92 = vunpack.c.l.b16 %v44
    %v93 = vunpack.c.l.b16 %v45
    %v94 = vunpack.c.l.b16 %v46
    %v95 = vunpack.c.l.b16 %v47
    %v96 = vunpack.c.l.b16 %v48
    %v97 = vunpack.c.l.b16 %v49
    %v98 = vunpack.c.l.b16 %v50
    %v99 = vunpack.c.l.b16 %v51
    %v100 = vunpack.c.l.b16 %v52
    %v101 = vunpack.c.l.b16 %v53
    %v102 = vunpack.c.l.b16 %v54
    %v103 = vunpack.c.l.b16 %v55
    %v104 = vunpack.c.l.b16 %v56
    %v105 = vpack.c.b16 %v90, %v89
    %v106 = vpack.c.b16 %v92, %v91
    %v107 = vpack.c.b16 %v94, %v93
    %v108 = vpack.c.b16 %v96, %v95
    %v109 = vpack.c.b16 %v98, %v97
    %v110 = vpack.c.b16 %v100, %v99
    %v111 = vpack.c.b16 %v102, %v101
    %v112 = vpack.c.b16 %v104, %v103
    %v137 = vunpack.c.l.b16 %v57
    %v138 = vunpack.c.l.b16 %v58
    %v139 = vunpack.c.l.b16 %v59
    %v140 = vunpack.c.l.b16 %v60
    %v141 = vunpack.c.l.b16 %v61
    %v142 = vunpack.c.l.b16 %v62
    %v143 = vunpack.c.l.b16 %v63
    %v144 = vunpack.c.l.b16 %v64
    %v145 = vunpack.c.l.b16 %v65
    %v146 = vunpack.c.l.b16 %v66
    %v147 = vunpack.c.l.b16 %v67
    %v148 = vunpack.c.l.b16 %v68
    %v149 = vunpack.c.l.b16 %v69
    %v150 = vunpack.c.l.b16 %v70
    %v151 = vunpack.c.l.b16 %v71
    %v152 = vunpack.c.l.b16 %v72
    %v153 = vpack.c.b16 %v138, %v137
    %v154 = vpack.c.b16 %v140, %v139
    %v155 = vpack.c.b16 %v142, %v141
    %v156 = vpack.c.b16 %v144, %v143
    %v157 = vpack.c.b16 %v146, %v145
    %v158 = vpack.c.b16 %v148, %v147
    %v159 = vpack.c.b16 %v150, %v149
    %v160 = vpack.c.b16 %v152, %v151
    %169 = vmatprep.subr.bf16.mxu0 0
    %170 = vmatpush1.bf16.msra.mxu0 %v153
    %171 = vmatprep.subr.bf16.mxu0 0
    %172 = vmatpush1.bf16.msra.mxu0 %v154
    %173 = vmatprep.subr.bf16.mxu0 0
    %174 = vmatpush1.bf16.msra.mxu0 %v155
    %175 = vmatprep.subr.bf16.mxu0 0
    %176 = vmatpush1.bf16.msra.mxu0 %v156
    %177 = vmatprep.subr.bf16.mxu0 0
    %178 = vmatpush1.bf16.msra.mxu0 %v157
    %179 = vmatprep.subr.bf16.mxu0 0
    %180 = vmatpush1.bf16.msra.mxu0 %v158
    %181 = vmatprep.subr.bf16.mxu0 0
    %182 = vmatpush1.bf16.msra.mxu0 %v159
    %183 = vmatprep.subr.bf16.mxu0 0
    %184 = vmatpush1.bf16.msra.mxu0 %v160
    %185 = vmatprep.subr.bf16.mxu0 0
    %186 = vmatpush1.bf16.msra.mxu0 0
    %187 = vmatprep.subr.bf16.mxu0 0
    %188 = vmatpush1.bf16.msra.mxu0 0
    %189 = vmatprep.subr.bf16.mxu0 0
    %190 = vmatpush1.bf16.msra.mxu0 0
    %191 = vmatprep.subr.bf16.mxu0 0
    %192 = vmatpush1.bf16.msra.mxu0 0
    %193 = vmatprep.subr.bf16.mxu0 0
    %194 = vmatpush1.bf16.msra.mxu0 0
    %195 = vmatprep.subr.bf16.mxu0 0
    %196 = vmatpush1.bf16.msra.mxu0 0
    %197 = vmatprep.subr.bf16.mxu0 0
    %198 = vmatpush1.bf16.msra.mxu0 0
    %199 = vmatprep.subr.bf16.mxu0 0
    %200 = vmatpush1.bf16.msra.mxu0 0
    %201 = vmatprep.mubr.bf16.mxu0 0
    %202 = vmatmul.mubr.bf16.gmra.mrb[0].mxu0 %v105
    %v203 = vpop.f32.mrb[0].mxu0
    %v204 = vadd.f32 0.0, %v203
    %v205 = vpop.f32.mrb[0].mxu0
    %v206 = vpop.f32.mrb[0].mxu0
    %v207 = vadd.f32 0.0, %v206
    %v208 = vpop.f32.mrb[0].mxu0
    %209 = vmatprep.mubr.bf16.mxu0 0
    %210 = vmatmul.mubr.bf16.gmra.mrb[0].mxu0 %v106
    %v211 = vpop.f32.mrb[0].mxu0
    %v212 = vadd.f32 0.0, %v211
    %v213 = vpop.f32.mrb[0].mxu0
    %v214 = vpop.f32.mrb[0].mxu0
    %v215 = vadd.f32 0.0, %v214
    %v216 = vpop.f32.mrb[0].mxu0
    %217 = vmatprep.mubr.bf16.mxu0 0
    %218 = vmatmul.mubr.bf16.gmra.mrb[0].mxu0 %v107
    %v219 = vpop.f32.mrb[0].mxu0
    %v220 = vadd.f32 0.0, %v219
    %v221 = vpop.f32.mrb[0].mxu0
    %v222 = vpop.f32.mrb[0].mxu0
    %v223 = vadd.f32 0.0, %v222
    %v224 = vpop.f32.mrb[0].mxu0
    %225 = vmatprep.mubr.bf16.mxu0 0
    %226 = vmatmul.mubr.bf16.gmra.mrb[0].mxu0 %v108
    %v227 = vpop.f32.mrb[0].mxu0
    %v228 = vadd.f32 0.0, %v227
    %v229 = vpop.f32.mrb[0].mxu0
    %v230 = vpop.f32.mrb[0].mxu0
    %v231 = vadd.f32 0.0, %v230
    %v232 = vpop.f32.mrb[0].mxu0
    %233 = vmatprep.mubr.bf16.mxu0 0
    %234 = vmatmul.mubr.bf16.gmra.mrb[0].mxu0 %v109
    %v235 = vpop.f32.mrb[0].mxu0
    %v236 = vadd.f32 0.0, %v235
    %v237 = vpop.f32.mrb[0].mxu0
    %v238 = vpop.f32.mrb[0].mxu0
    %v239 = vadd.f32 0.0, %v238
    %v240 = vpop.f32.mrb[0].mxu0
    %241 = vmatprep.mubr.bf16.mxu0 0
    %242 = vmatmul.mubr.bf16.gmra.mrb[0].mxu0 %v110
    %v243 = vpop.f32.mrb[0].mxu0
    %v244 = vadd.f32 0.0, %v243
    %v245 = vpop.f32.mrb[0].mxu0
    %v246 = vpop.f32.mrb[0].mxu0
    %v247 = vadd.f32 0.0, %v246
    %v248 = vpop.f32.mrb[0].mxu0
    %249 = vmatprep.mubr.bf16.mxu0 0
    %250 = vmatmul.mubr.bf16.gmra.mrb[0].mxu0 %v111
    %v251 = vpop.f32.mrb[0].mxu0
    %v252 = vadd.f32 0.0, %v251
    %v253 = vpop.f32.mrb[0].mxu0
    %v254 = vpop.f32.mrb[0].mxu0
    %v255 = vadd.f32 0.0, %v254
    %v256 = vpop.f32.mrb[0].mxu0
    %257 = vmatprep.mubr.bf16.mxu0 0
    %258 = vmatmul.mubr.bf16.gmra.mrb[0].mxu0 %v112
    %v259 = vpop.f32.mrb[0].mxu0
    %v260 = vadd.f32 0.0, %v259
    %v261 = vpop.f32.mrb[0].mxu0
    %v262 = vpop.f32.mrb[0].mxu0
    %v263 = vadd.f32 0.0, %v262
    %v264 = vpop.f32.mrb[0].mxu0
    %265 = vdwg.mxu0
    %v266 = vpack.c.bf16 %v207, %v204
    %v267 = vpack.c.bf16 %v215, %v212
    %v268 = vpack.c.bf16 %v223, %v220
    %v269 = vpack.c.bf16 %v231, %v228
    %v270 = vpack.c.bf16 %v239, %v236
    %v271 = vpack.c.bf16 %v247, %v244
    %v272 = vpack.c.bf16 %v255, %v252
    %v273 = vpack.c.bf16 %v263, %v260
    %v282 = vunpack.c.l.b16 %v266
    %v283 = vunpack.c.h.b16 %v266
    %v284 = vunpack.c.l.b16 %v267
    %v285 = vunpack.c.h.b16 %v267
    %v286 = vunpack.c.l.b16 %v268
    %v287 = vunpack.c.h.b16 %v268
    %v288 = vunpack.c.l.b16 %v269
    %v289 = vunpack.c.h.b16 %v269
    %v290 = vunpack.c.l.b16 %v270
    %v291 = vunpack.c.h.b16 %v270
    %v292 = vunpack.c.l.b16 %v271
    %v293 = vunpack.c.h.b16 %v271
    %v294 = vunpack.c.l.b16 %v272
    %v295 = vunpack.c.h.b16 %v272
    %v296 = vunpack.c.l.b16 %v273
    %v297 = vunpack.c.h.b16 %v273
    %v298 = vpack.c.b16 %v282, %v282
    %v299 = vpack.c.b16 %v283, %v283
    %v300 = vpack.c.b16 %v284, %v284
    %v301 = vpack.c.b16 %v285, %v285
    %v302 = vpack.c.b16 %v286, %v286
    %v303 = vpack.c.b16 %v287, %v287
    %v304 = vpack.c.b16 %v288, %v288
    %v305 = vpack.c.b16 %v289, %v289
    %v306 = vpack.c.b16 %v290, %v290
    %v307 = vpack.c.b16 %v291, %v291
    %v308 = vpack.c.b16 %v292, %v292
    %v309 = vpack.c.b16 %v293, %v293
    %v310 = vpack.c.b16 %v294, %v294
    %v311 = vpack.c.b16 %v295, %v295
    %v312 = vpack.c.b16 %v296, %v296
    %v313 = vpack.c.b16 %v297, %v297
    %330 = vst [vmem:[#allocation7] sm:$0xf] %v298
    %331 = vst [vmem:[#allocation7 + $0x4] sm:$0xf] %v299
    %332 = vst [vmem:[#allocation7 + $0x8] sm:$0xf] %v300
    %333 = vst [vmem:[#allocation7 + $0xc] sm:$0xf] %v301
    %334 = vst [vmem:[#allocation7 + $0x10] sm:$0xf] %v302
    %335 = vst [vmem:[#allocation7 + $0x14] sm:$0xf] %v303
    %336 = vst [vmem:[#allocation7 + $0x18] sm:$0xf] %v304
    %337 = vst [vmem:[#allocation7 + $0x1c] sm:$0xf] %v305
    %338 = vst [vmem:[#allocation7 + $0x20] sm:$0xf] %v306
    %339 = vst [vmem:[#allocation7 + $0x24] sm:$0xf] %v307
    %340 = vst [vmem:[#allocation7 + $0x28] sm:$0xf] %v308
    %341 = vst [vmem:[#allocation7 + $0x2c] sm:$0xf] %v309
    %342 = vst [vmem:[#allocation7 + $0x30] sm:$0xf] %v310
    %343 = vst [vmem:[#allocation7 + $0x34] sm:$0xf] %v311
    %344 = vst [vmem:[#allocation7 + $0x38] sm:$0xf] %v312
    %345 = vst [vmem:[#allocation7 + $0x3c] sm:$0xf] %v313
    // Predicated region
    $region18: #{tpu_custom_call.1} parent=1 // pred_check
      _
    $region19: #{tpu_custom_call.1} parent=1 // pred_check_branch
      %347 = sbr.rel (0) target = $region21
    $region20: #{tpu_custom_call.1} parent=1 // pred_region
      %s349 = ssub.s32 1024, 1024
      %350 = vsyncadd [#allocation4], %s349
      %s351 = sshll.u32 [#allocation7], 4
      %s352 = int_to_ptr.vmem [resolvable:$true] %s351
      %357 = dma.vmem_to_hbm [thread:$0]  %s352, 1024, %s2, [#allocation4], 64, 64, 4
    $region21: #{tpu_custom_call.1} parent=1 // pred_fallthru
      _
    // Predicated region
    $region22: #{tpu_custom_call.1} parent=1 // pred_check
      _
    $region23: #{tpu_custom_call.1} parent=1 // pred_check_branch
      %359 = sbr.rel (0) target = $region25
    $region24: #{tpu_custom_call.1} parent=1 // pred_region
      %360 = dma.done [#allocation4], 1024
    $region25: #{tpu_custom_call.1} parent=1 // pred_fallthru
      _
    %361 = vsyncpa [#allocation3], 1
    %362 = vsyncpa [#allocation6], 1
    %363 = vsyncpa [#allocation4], 1

</llo_original>
